<compile_context>
chip_gen: v7x
topology: tpu7x:2x2x1
jax: 0.10.0
libtpu: 0.0.40
codegen_flags: <defaults>
</compile_context>

<pallas_src>
import functools

import jax
import jax.numpy as jnp
from jax.experimental import pallas as pl
from jax.experimental.pallas import tpu as pltpu


def _focal_kernel(x_ref, t_ref, a_ref, out_ref, *,
                  gamma, has_alpha, n_total, hw_total,
                  tile_n, tile_hw, mask_n, mask_hw):
    x = x_ref[...].astype(jnp.float32)            # (tile_n, C, tile_hw)
    tgt = t_ref[...]                              # (tile_n, 1, tile_hw) int32

    # Shifted logits; the target-class entry is gathered BEFORE subtracting
    # the log-sum-exp so the full log-softmax tensor is never materialized.
    x_max = jnp.max(x, axis=1, keepdims=True)
    z = x - x_max
    lse = jnp.log(jnp.sum(jnp.exp(z), axis=1, keepdims=True))

    cls = jax.lax.broadcasted_iota(jnp.int32, x.shape, 1)
    onehot = cls == tgt                           # (tile_n, C, tile_hw) bool
    zt = jnp.sum(jnp.where(onehot, z, 0.0), axis=1, keepdims=True)
    logpt = zt - lse                              # (tile_n, 1, tile_hw)
    pt = jnp.exp(logpt)                           # pt BEFORE alpha scaling

    if has_alpha:
        a = a_ref[...].astype(jnp.float32)        # (1, C, 1) per-class alpha
        at = jnp.sum(jnp.where(onehot, a, 0.0), axis=1, keepdims=True)
        logpt = logpt * at

    # Focal term; integer gamma avoids pow and NaNs from pt > 1 rounding.
    base = jnp.maximum(1.0 - pt, 0.0)
    g = float(gamma)
    if g == 0.0:
        focal = jnp.ones_like(base)
    elif g.is_integer() and 1 <= int(g) <= 8:
        focal = base
        for _ in range(int(g) - 1):
            focal = focal * base
    else:
        focal = base ** g

    loss = -focal * logpt                         # (tile_n, 1, tile_hw)

    def _write(v):
        out_ref[...] = jnp.full(out_ref.shape, jnp.sum(v), dtype=out_ref.dtype)

    if mask_hw or mask_n:
        i = pl.program_id(0)
        j = pl.program_id(1)
        preds = []
        if mask_hw:
            preds.append(j == pl.num_programs(1) - 1)
        if mask_n:
            preds.append(i == pl.num_programs(0) - 1)
        tail = preds[0]
        for p in preds[1:]:
            tail = jnp.logical_or(tail, p)

        @pl.when(tail)
        def _():
            # Only tail blocks pay for the iota + compare + select.  This must
            # stay a select (not a multiply): padded lanes hold garbage logits
            # whose exp()/log() may be NaN/Inf.
            valid = None
            if mask_hw:
                hw_pos = (jax.lax.broadcasted_iota(jnp.int32, loss.shape, 2)
                          + j * tile_hw)
                valid = hw_pos < hw_total
            if mask_n:
                n_pos = (jax.lax.broadcasted_iota(jnp.int32, loss.shape, 0)
                         + i * tile_n)
                vn = n_pos < n_total
                valid = vn if valid is None else jnp.logical_and(valid, vn)
            _write(jnp.where(valid, loss, 0.0))

        @pl.when(jnp.logical_not(tail))
        def _():
            _write(loss)
    else:
        _write(loss)


def _round_up(v, m):
    return -(-v // m) * m


def focal_loss(logits, target, *, gamma=2.0, alpha=None, size_average=True,
               tile_bytes=None):
    """Focal loss forward matching the PyTorch FocalLoss module.

    logits: (N, C) or (N, C, *spatial), any float dtype (bf16 upcast in-kernel).
    target: (N,) / (N, *spatial) integer class ids.
    Note: out-of-range target ids contribute 0 loss instead of erroring like
    PyTorch's gather.
    """
    if logits.ndim < 2:
        raise ValueError("logits must have at least 2 dims (N, C, ...)")
    C = int(logits.shape[1])
    n_positions = int(target.size)                # N * prod(spatial)

    if logits.ndim == 2:
        # 2-D fast path: put the batch on the lane axis (otherwise hw == 1
        # would leave a single element on the 128-wide lane axis).
        N, hw = 1, int(logits.shape[0])
        x = logits.T.reshape(1, C, hw)
        t = target.reshape(1, 1, hw).astype(jnp.int32)
    else:
        N = int(logits.shape[0])
        hw = 1
        for d in logits.shape[2:]:
            hw *= int(d)
        x = logits.reshape(N, C, hw)              # no transpose, no pad
        t = target.reshape(N, 1, hw).astype(jnp.int32)

    if alpha is None:
        has_alpha = False
        alpha_arr = jnp.ones((1, C, 1), jnp.float32)
    else:
        has_alpha = True
        if isinstance(alpha, (float, int)):
            a = jnp.array([alpha, 1.0 - alpha], jnp.float32)
        else:
            a = jnp.asarray(alpha, dtype=jnp.float32).reshape(-1)
        if a.shape[0] < C:
            raise ValueError(f"alpha has {a.shape[0]} entries but C={C}")
        alpha_arr = a[:C].reshape(1, C, 1)

    # --- VMEM limit (generation aware) ---------------------------------------
    try:
        vmem_cap = int(pltpu.get_tpu_info().vmem_capacity_bytes)
    except Exception:
        vmem_cap = 64 << 20                       # assume smallest (v7x-class)
    vmem_limit = min(max(vmem_cap - (16 << 20), 32 << 20), 96 << 20)

    # --- tile selection from PADDED footprints -------------------------------
    itemsize = jnp.dtype(logits.dtype).itemsize
    sublane = max(1, 32 // max(1, itemsize))      # 8 f32 / 16 bf16 / 32 int8
    c_pad = _round_up(C, sublane)
    logit_col = c_pad * itemsize                  # padded logits bytes / column
    tgt_col = 8 * 4                               # int32; size-1 axis pads to 8

    if tile_bytes is None:
        # Padded logits-tile target; larger on v5e/v6e (128 MiB physical VMEM)
        # than on v7x-class parts (64 MiB physical VMEM).
        tile_bytes = (6 << 20) if vmem_limit > (48 << 20) else (3 << 20)

    col_budget = max(128, tile_bytes // logit_col)
    if hw <= 128:
        tile_hw = hw                              # full (exempt) lane dim
    else:
        tile_hw = max(128, min((hw // 128) * 128, (col_budget // 128) * 128))
    tile_hw_pad = _round_up(tile_hw, 128)

    tile_n = max(1, tile_bytes // (logit_col * tile_hw_pad))
    tile_n = min(tile_n, N)

    # Safety net: padded, double-buffered inputs must fit well under the limit
    # (the rest is left for in-kernel f32 intermediates).
    per_step = 2 * tile_n * tile_hw_pad * (logit_col + tgt_col)
    while per_step > vmem_limit // 2:
        if tile_n > 1:
            tile_n = max(1, tile_n // 2)
        elif hw > 128 and tile_hw > 128:
            tile_hw = max(128, ((tile_hw // 2) // 128) * 128)
            tile_hw_pad = _round_up(tile_hw, 128)
        else:
            break
        per_step = 2 * tile_n * tile_hw_pad * (logit_col + tgt_col)

    grid_hw = -(-hw // tile_hw)
    grid_n = -(-N // tile_n)
    mask_hw = (hw % tile_hw) != 0
    mask_n = (N % tile_n) != 0

    kernel = functools.partial(
        _focal_kernel, gamma=float(gamma), has_alpha=has_alpha,
        n_total=N, hw_total=hw, tile_n=tile_n, tile_hw=tile_hw,
        mask_n=mask_n, mask_hw=mask_hw)

    partials = pl.pallas_call(
        kernel,
        out_shape=jax.ShapeDtypeStruct((grid_n * grid_hw, 1, 128), jnp.float32),
        grid=(grid_n, grid_hw),
        in_specs=[
            pl.BlockSpec((tile_n, C, tile_hw), lambda i, j: (i, 0, j)),  # logits
            pl.BlockSpec((tile_n, 1, tile_hw), lambda i, j: (i, 0, j)),  # targets
            pl.BlockSpec((1, C, 1), lambda i, j: (0, 0, 0)),             # alpha
        ],
        out_specs=pl.BlockSpec((1, 1, 128),
                               lambda i, j: (i * grid_hw + j, 0, 0)),
        compiler_params=pltpu.CompilerParams(
            dimension_semantics=("parallel", "parallel"),
            vmem_limit_bytes=int(vmem_limit)),
    )(x, t, alpha_arr)

    total = jnp.sum(partials[:, 0, 0])
    if size_average:
        return total / jnp.float32(n_positions)
    return total


def _focal_loss_ref(logits, target, gamma=2.0, alpha=None, size_average=True):
    C = logits.shape[1]
    if logits.ndim > 2:
        N = logits.shape[0]
        x = jnp.moveaxis(logits.reshape(N, C, -1), 1, 2).reshape(-1, C)
    else:
        x = logits
    x = x.astype(jnp.float32)
    t = target.reshape(-1).astype(jnp.int32)
    logp = jax.nn.log_softmax(x, axis=1)
    logpt = jnp.take_along_axis(logp, t[:, None], axis=1)[:, 0]
    pt = jnp.exp(logpt)
    if alpha is not None:
        if isinstance(alpha, (float, int)):
            a = jnp.array([alpha, 1.0 - alpha], jnp.float32)
        else:
            a = jnp.asarray(alpha, dtype=jnp.float32).reshape(-1)
        logpt = logpt * a[t]
    loss = -((1.0 - pt) ** gamma) * logpt
    return loss.mean() if size_average else loss.sum()


if __name__ == "__main__":
    key = jax.random.PRNGKey(0)
    k1, k2, k3, k4, k5, k6 = jax.random.split(key, 6)

    # Check 1: N=2, C=4, 16x16 spatial, mean reduction, no alpha, default tiles.
    N, C, H, W = 2, 4, 16, 16
    logits = jax.random.normal(k1, (N, C, H, W), dtype=jnp.float32)
    target = jax.random.randint(k2, (N, H, W), 0, C, dtype=jnp.int32)
    out = jax.block_until_ready(focal_loss(logits, target, gamma=2.0,
                                           alpha=None, size_average=True))
    ref = _focal_loss_ref(logits, target, gamma=2.0, alpha=None,
                          size_average=True)
    assert jnp.allclose(out, ref, atol=1e-5, rtol=1e-5), (out, ref)

    # Check 2: per-class alpha, sum reduction, small tile budget -> multi-step
    # grid with ragged tail blocks along BOTH axes (masked corner block) and
    # multiple per-cell partial outputs.
    N2, H2, W2 = 3, 16, 20                        # hw = 320: 256-tile + 64 tail
    logits2 = jax.random.normal(k3, (N2, C, H2, W2), dtype=jnp.float32)
    target2 = jax.random.randint(k4, (N2, H2, W2), 0, C, dtype=jnp.int32)
    alpha = [0.1, 0.2, 0.3, 0.4]
    out2 = jax.block_until_ready(
        focal_loss(logits2, target2, gamma=2.0, alpha=alpha,
                   size_average=False, tile_bytes=16384))
    ref2 = _focal_loss_ref(logits2, target2, gamma=2.0, alpha=alpha,
                           size_average=False)
    assert jnp.allclose(out2, ref2, atol=1e-2, rtol=1e-4), (out2, ref2)

    # Check 3: pure 2-D (N, C) classification fast path, scalar alpha, bf16.
    logits3 = jax.random.normal(k5, (8, 2), dtype=jnp.bfloat16)
    target3 = jax.random.randint(k6, (8,), 0, 2, dtype=jnp.int32)
    out3 = jax.block_until_ready(
        focal_loss(logits3, target3, gamma=2.0, alpha=0.25, size_average=True))
    ref3 = _focal_loss_ref(logits3.astype(jnp.float32), target3, gamma=2.0,
                           alpha=0.25, size_average=True)
    assert jnp.allclose(out3, ref3, atol=1e-5, rtol=1e-5), (out3, ref3)

    print("KERNEL_OK")
</pallas_src>

<mosaic_0001>
module attributes {stable_mosaic.version = 11 : i64} {
  func.func @_focal_kernel(%arg0: i32, %arg1: i32, %arg2: memref<2x4x256xf32, #tpu.memory_space<vmem>>, %arg3: memref<2x1x256xi32, #tpu.memory_space<vmem>>, %arg4: memref<1x4x1xf32, #tpu.memory_space<vmem>>, %arg5: memref<1x1x128xf32, #tpu.memory_space<vmem>>) attributes {dimension_semantics = [#tpu.dimension_semantics<parallel>, #tpu.dimension_semantics<parallel>], iteration_bounds = array<i64: 1, 1>, scalar_prefetch = 0 : i64, scratch_operands = 0 : i64, tpu.core_type = #tpu.core_type<tc>, window_params = [{transform_indices = @transform_0, window_bounds = array<i64: 2, 4, 256>}, {transform_indices = @transform_1, window_bounds = array<i64: 2, 1, 256>}, {pipeline_mode = #tpu.pipeline_mode<synchronous>, transform_indices = @transform_2, window_bounds = array<i64: 1, 4, 1>}, {transform_indices = @transform_3, window_bounds = array<i64: 1, 1, 128>}]} {
    %c0 = arith.constant 0 : index
    %c0_0 = arith.constant 0 : index
    %c0_1 = arith.constant 0 : index
    %0 = vector.load %arg2[%c0, %c0_0, %c0_1] : memref<2x4x256xf32, #tpu.memory_space<vmem>>, vector<2x4x256xf32>
    %c0_2 = arith.constant 0 : index
    %c0_3 = arith.constant 0 : index
    %c0_4 = arith.constant 0 : index
    %1 = vector.load %arg3[%c0_2, %c0_3, %c0_4] : memref<2x1x256xi32, #tpu.memory_space<vmem>>, vector<2x1x256xi32>
    %cst = arith.constant dense<0xFF800000> : vector<2x256xf32>
    %2 = vector.multi_reduction <maximumf>, %0, %cst [1] : vector<2x4x256xf32> to vector<2x256xf32>
    %3 = vector.shape_cast %2 : vector<2x256xf32> to vector<2x1x256xf32>
    %4 = vector.broadcast %3 : vector<2x1x256xf32> to vector<2x4x256xf32>
    %5 = arith.subf %0, %4 : vector<2x4x256xf32>
    %6 = math.exp %5 : vector<2x4x256xf32>
    %cst_5 = arith.constant dense<0.000000e+00> : vector<2x256xf32>
    %7 = vector.multi_reduction <add>, %6, %cst_5 [1] : vector<2x4x256xf32> to vector<2x256xf32>
    %8 = vector.shape_cast %7 : vector<2x256xf32> to vector<2x1x256xf32>
    %9 = math.log %8 : vector<2x1x256xf32>
    %10 = tpu.iota {dimensions = array<i32: 1>} : vector<2x4x256xi32>
    %11 = vector.broadcast %1 : vector<2x1x256xi32> to vector<2x4x256xi32>
    %12 = arith.cmpi eq, %10, %11 : vector<2x4x256xi32>
    %cst_6 = arith.constant 0.000000e+00 : f32
    %13 = vector.broadcast %cst_6 : f32 to vector<2x4x256xf32>
    %14 = arith.select %12, %5, %13 : vector<2x4x256xi1>, vector<2x4x256xf32>
    %cst_7 = arith.constant dense<0.000000e+00> : vector<2x256xf32>
    %15 = vector.multi_reduction <add>, %14, %cst_7 [1] : vector<2x4x256xf32> to vector<2x256xf32>
    %16 = vector.shape_cast %15 : vector<2x256xf32> to vector<2x1x256xf32>
    %17 = arith.subf %16, %9 : vector<2x1x256xf32>
    %18 = math.exp %17 : vector<2x1x256xf32>
    %cst_8 = arith.constant 1.000000e+00 : f32
    %19 = vector.broadcast %cst_8 : f32 to vector<2x1x256xf32>
    %20 = arith.subf %19, %18 : vector<2x1x256xf32>
    %cst_9 = arith.constant 0.000000e+00 : f32
    %21 = vector.broadcast %cst_9 : f32 to vector<2x1x256xf32>
    %22 = arith.maximumf %20, %21 : vector<2x1x256xf32>
    %23 = arith.mulf %22, %22 : vector<2x1x256xf32>
    %cst_10 = arith.constant 0.000000e+00 : f32
    %24 = vector.broadcast %cst_10 : f32 to vector<2x1x256xf32>
    %25 = arith.subf %24, %23 : vector<2x1x256xf32>
    %26 = arith.mulf %25, %17 : vector<2x1x256xf32>
    %27 = vector.shape_cast %26 : vector<2x1x256xf32> to vector<1x2x1x256xf32>
    %cst_11 = arith.constant dense<0.000000e+00> : vector<1xf32>
    %28 = vector.multi_reduction <add>, %27, %cst_11 [1, 2, 3] : vector<1x2x1x256xf32> to vector<1xf32>
    %29 = vector.shape_cast %28 : vector<1xf32> to vector<1x1x1x1xf32>
    %30 = vector.extract %29[0, 0, 0, 0] : f32 from vector<1x1x1x1xf32>
    %31 = vector.broadcast %30 : f32 to vector<1x1x128xf32>
    %c0_12 = arith.constant 0 : index
    %c0_13 = arith.constant 0 : index
    %c0_14 = arith.constant 0 : index
    %32 = vector.load %arg5[%c0_12, %c0_13, %c0_14] : memref<1x1x128xf32, #tpu.memory_space<vmem>>, vector<1x1x128xf32>
    tpu.vector_store %arg5[%c0_12, %c0_13, %c0_14], %31 {strides = array<i32>} : memref<1x1x128xf32, #tpu.memory_space<vmem>>, vector<1x1x128xf32>,
    return
  }
  func.func @transform_0(%arg0: i32, %arg1: i32) -> (i32, i32, i32) {
    %c0_i32 = arith.constant 0 : i32
    %c0_i32_0 = arith.constant 0 : i32
    return %arg0, %c0_i32, %arg1 : i32, i32, i32
  }
  func.func @transform_1(%arg0: i32, %arg1: i32) -> (i32, i32, i32) {
    %c0_i32 = arith.constant 0 : i32
    %c0_i32_0 = arith.constant 0 : i32
    return %arg0, %c0_i32, %arg1 : i32, i32, i32
  }
  func.func @transform_2(%arg0: i32, %arg1: i32) -> (i32, i32, i32) {
    %c0_i32 = arith.constant 0 : i32
    %c0_i32_0 = arith.constant 0 : i32
    %c0_i32_1 = arith.constant 0 : i32
    %c0_i32_2 = arith.constant 0 : i32
    return %c0_i32, %c0_i32_0, %c0_i32_1 : i32, i32, i32
  }
  func.func @transform_3(%arg0: i32, %arg1: i32) -> (i32, i32, i32) {
    %c1_i32 = arith.constant 1 : i32
    %0 = arith.muli %arg0, %c1_i32 : i32
    %1 = arith.addi %0, %arg1 : i32
    %c0_i32 = arith.constant 0 : i32
    %c0_i32_0 = arith.constant 0 : i32
    %c0_i32_1 = arith.constant 0 : i32
    return %1, %c0_i32, %c0_i32_0 : i32, i32, i32
  }
}

</mosaic_0001>

<llo_original>
// kernel: tpu_custom_call.1
$region0: #{tpu_custom_call.1}
  #allocation0 [shape = 'u32[]', space=smem, size = 0x4, offset = 0x4, fixed_abs, tag = 'smem constant byte address 0x4 - core index']
  #allocation1 [shape = 'u32[144,128]{1,0:T(1,128)}', space=vmem, size = 0x12000, scoped, tag = 'internal scratch']
  %s0 = inlined_call_operand.hbm [shape: f32[2,4,256], index: 0, kind: input, shape index: {}]
  %s1 = inlined_call_operand.vmem [shape: s32[2,1,256], index: 1, kind: input, shape index: {}]
  %s2 = inlined_call_operand.vmem [shape: f32[1,4,1], index: 2, kind: input, shape index: {}]
  %s3 = inlined_call_operand.hbm [shape: f32[1,1,128], index: 3, kind: output, shape index: {}]
  %s4 = sld [smem:[#allocation0]]
  $region26: #{tpu_custom_call.1} parent=0
    _
  %s6 = ssub.s32 1, %s4
  %s7 = scalar_select 0, %s6, %s4
  $region1: #{tpu_custom_call.1} parent=0
    #allocation2 [shape = 'u8[8192]{0}', space=vmem, size = 0x2000, scoped, tag = 'input window, operand 0, single buffered']
    #allocation3 [shape = 's32[1]{0}', space=sflag, size = 0x4, scoped, tag = 'scoped memory for tpu_custom_call.1']
    #allocation4 [shape = 's32[1]{0}', space=sflag, size = 0x4, scoped, tag = 'scoped memory for tpu_custom_call.1']
    #allocation5 [shape = 'u8[512]{0}', space=vmem, size = 0x400, scoped, tag = 'output window, operand 0, single buffered']
    %8 = vsyncpa [#allocation3], 0
    %9 = vsyncpa [#allocation4], 0
    // Predicated region
    $region2: #{tpu_custom_call.1} parent=1 // pred_check
      _
    $region3: #{tpu_custom_call.1} parent=1 // pred_check_branch
      %11 = sbr.rel (0) target = $region5
    $region4: #{tpu_custom_call.1} parent=1 // pred_region
      %s13 = ssub.s32 256, 256
      %14 = vsyncadd [#allocation3], %s13
      %s15 = sshll.u32 [#allocation2], 4
      %s16 = int_to_ptr.vmem [resolvable:$true] %s15
      %21 = dma.hbm_to_vmem [thread:$0]  %s0, 256, %s16, [#allocation3], 128, 128, 8
    $region5: #{tpu_custom_call.1} parent=1 // pred_fallthru
      _
    // Predicated region
    $region6: #{tpu_custom_call.1} parent=1 // pred_check
      _
    $region7: #{tpu_custom_call.1} parent=1 // pred_check_branch
      %23 = sbr.rel (0) target = $region9
    $region8: #{tpu_custom_call.1} parent=1 // pred_region
      _
    $region9: #{tpu_custom_call.1} parent=1 // pred_fallthru
      _
    // Predicated region
    $region10: #{tpu_custom_call.1} parent=1 // pred_check
      _
    $region11: #{tpu_custom_call.1} parent=1 // pred_check_branch
      %25 = sbr.rel (0) target = $region13
    $region12: #{tpu_custom_call.1} parent=1 // pred_region
      _
    $region13: #{tpu_custom_call.1} parent=1 // pred_fallthru
      _
    // Predicated region
    $region14: #{tpu_custom_call.1} parent=1 // pred_check
      _
    $region15: #{tpu_custom_call.1} parent=1 // pred_check_branch
      %27 = sbr.rel (0) target = $region17
    $region16: #{tpu_custom_call.1} parent=1 // pred_region
      %28 = dma.done [#allocation3], 256
    $region17: #{tpu_custom_call.1} parent=1 // pred_fallthru
      _
    %s29 = sadd.s32 0, 0
    %v30 = vld [vmem:[#allocation2] sm:$0xff]
    %v31 = vld [vmem:[#allocation2 + $0x8] sm:$0xff]
    %v32 = vld [vmem:[%s1] sm:$0x3]
    %v33 = vld [vmem:[%s1 + $0x2] sm:$0x3]
    %v36 = vcombine.high %v30, %v30
    %v37 = vcombine.high %v31, %v31
    %vm40 = vcmask 1043456
    %v41 = vsel %vm40, %v30, -inf
    %v42 = vrot.slane %v41, 4
    %v43 = vmax.f32 %v41, %v42
    %v44 = vrot.slane %v43, 2
    %v45 = vmax.f32 %v43, %v44
    %v46 = vrot.slane %v45, 1
    %v47 = vmax.f32 %v45, %v46
    %v48 = vsel %vm40, %v36, -inf
    %v49 = vrot.slane %v48, 4
    %v50 = vmax.f32 %v48, %v49
    %v51 = vrot.slane %v50, 2
    %v52 = vmax.f32 %v50, %v51
    %v53 = vrot.slane %v52, 1
    %v54 = vmax.f32 %v52, %v53
    %v55 = vsel %vm40, %v31, -inf
    %v56 = vrot.slane %v55, 4
    %v57 = vmax.f32 %v55, %v56
    %v58 = vrot.slane %v57, 2
    %v59 = vmax.f32 %v57, %v58
    %v60 = vrot.slane %v59, 1
    %v61 = vmax.f32 %v59, %v60
    %v62 = vsel %vm40, %v37, -inf
    %v63 = vrot.slane %v62, 4
    %v64 = vmax.f32 %v62, %v63
    %v65 = vrot.slane %v64, 2
    %v66 = vmax.f32 %v64, %v65
    %v67 = vrot.slane %v66, 1
    %v68 = vmax.f32 %v66, %v67
    %v73 = vcombine.low %v47, %v54
    %v74 = vcombine.low %v61, %v68
    %v77 = vsub.f32 %v30, %v73
    %v78 = vsub.f32 %v31, %v74
    %v79 = vmul.f32 %v77, 1.442695
    %v80 = vpow.pop %v79
    %v81 = vmul.f32 %v78, 1.442695
    %v82 = vpow.pop %v81
    %v85 = vcombine.high %v80, %v80
    %v86 = vcombine.high %v82, %v82
    %v89 = vsel %vm40, %v80, 0.0
    %v90 = vrot.slane %v89, 4
    %v91 = vadd.f32 %v89, %v90
    %v92 = vrot.slane %v91, 2
    %v93 = vadd.f32 %v91, %v92
    %v94 = vrot.slane %v93, 1
    %v95 = vadd.f32 %v93, %v94
    %v96 = vsel %vm40, %v85, 0.0
    %v97 = vrot.slane %v96, 4
    %v98 = vadd.f32 %v96, %v97
    %v99 = vrot.slane %v98, 2
    %v100 = vadd.f32 %v98, %v99
    %v101 = vrot.slane %v100, 1
    %v102 = vadd.f32 %v100, %v101
    %v103 = vsel %vm40, %v82, 0.0
    %v104 = vrot.slane %v103, 4
    %v105 = vadd.f32 %v103, %v104
    %v106 = vrot.slane %v105, 2
    %v107 = vadd.f32 %v105, %v106
    %v108 = vrot.slane %v107, 1
    %v109 = vadd.f32 %v107, %v108
    %v110 = vsel %vm40, %v86, 0.0
    %v111 = vrot.slane %v110, 4
    %v112 = vadd.f32 %v110, %v111
    %v113 = vrot.slane %v112, 2
    %v114 = vadd.f32 %v112, %v113
    %v115 = vrot.slane %v114, 1
    %v116 = vadd.f32 %v114, %v115
    %v117 = vlog2.pop %v95
    %v118 = vmul.f32 %v117, 0.6931472
    %v119 = vlog2.pop %v102
    %v120 = vmul.f32 %v119, 0.6931472
    %v121 = vlog2.pop %v109
    %v122 = vmul.f32 %v121, 0.6931472
    %v123 = vlog2.pop %v116
    %v124 = vmul.f32 %v123, 0.6931472
    %v125 = vlaneseq
    %v126 = vshrl.u32 %v125, 7
    %v127 = vlaneseq
    %v128 = vshrl.u32 %v127, 7
    %v129 = vsub.s32 0, %v128
    %v130 = vrot.slane %v32, %v129
    %v131 = vlaneseq
    %v132 = vshrl.u32 %v131, 7
    %v133 = vsub.s32 1, %v132
    %v134 = vrot.slane %v32, %v133
    %v135 = vlaneseq
    %v136 = vshrl.u32 %v135, 7
    %v137 = vsub.s32 0, %v136
    %v138 = vrot.slane %v33, %v137
    %v139 = vlaneseq
    %v140 = vshrl.u32 %v139, 7
    %v141 = vsub.s32 1, %v140
    %v142 = vrot.slane %v33, %v141
    %vm143 = vcmp.eq.s32.totalorder %v126, %v130
    %vm144 = vcmp.eq.s32.totalorder %v126, %v134
    %vm145 = vcmp.eq.s32.totalorder %v126, %v138
    %vm146 = vcmp.eq.s32.totalorder %v126, %v142
    %v149 = vcombine.high %v77, %v77
    %v150 = vcombine.high %v78, %v78
    %v153 = vsel %vm143, %v77, 0.0
    %v154 = vsel %vm144, %v149, 0.0
    %v155 = vsel %vm145, %v78, 0.0
    %v156 = vsel %vm146, %v150, 0.0
    %v157 = vsel %vm40, %v153, 0.0
    %v158 = vrot.slane %v157, 4
    %v159 = vadd.f32 %v157, %v158
    %v160 = vrot.slane %v159, 2
    %v161 = vadd.f32 %v159, %v160
    %v162 = vrot.slane %v161, 1
    %v163 = vadd.f32 %v161, %v162
    %v164 = vsel %vm40, %v154, 0.0
    %v165 = vrot.slane %v164, 4
    %v166 = vadd.f32 %v164, %v165
    %v167 = vrot.slane %v166, 2
    %v168 = vadd.f32 %v166, %v167
    %v169 = vrot.slane %v168, 1
    %v170 = vadd.f32 %v168, %v169
    %v171 = vsel %vm40, %v155, 0.0
    %v172 = vrot.slane %v171, 4
    %v173 = vadd.f32 %v171, %v172
    %v174 = vrot.slane %v173, 2
    %v175 = vadd.f32 %v173, %v174
    %v176 = vrot.slane %v175, 1
    %v177 = vadd.f32 %v175, %v176
    %v178 = vsel %vm40, %v156, 0.0
    %v179 = vrot.slane %v178, 4
    %v180 = vadd.f32 %v178, %v179
    %v181 = vrot.slane %v180, 2
    %v182 = vadd.f32 %v180, %v181
    %v183 = vrot.slane %v182, 1
    %v184 = vadd.f32 %v182, %v183
    %v185 = vsub.f32 %v163, %v118
    %v186 = vsub.f32 %v170, %v120
    %v187 = vsub.f32 %v177, %v122
    %v188 = vsub.f32 %v184, %v124
    %v189 = vmul.f32 %v185, 1.442695
    %v190 = vpow.pop %v189
    %v191 = vmul.f32 %v186, 1.442695
    %v192 = vpow.pop %v191
    %v193 = vmul.f32 %v187, 1.442695
    %v194 = vpow.pop %v193
    %v195 = vmul.f32 %v188, 1.442695
    %v196 = vpow.pop %v195
    %v197 = vsub.f32 1.0, %v190
    %v198 = vsub.f32 1.0, %v192
    %v199 = vsub.f32 1.0, %v194
    %v200 = vsub.f32 1.0, %v196
    %v201 = vmax.f32 %v197, 0.0
    %v202 = vmax.f32 %v198, 0.0
    %v203 = vmax.f32 %v199, 0.0
    %v204 = vmax.f32 %v200, 0.0
    %v205 = vmul.f32 %v201, %v201
    %v206 = vmul.f32 %v202, %v202
    %v207 = vmul.f32 %v203, %v203
    %v208 = vmul.f32 %v204, %v204
    %v209 = vsub.f32 0.0, %v205
    %v210 = vsub.f32 0.0, %v206
    %v211 = vsub.f32 0.0, %v207
    %v212 = vsub.f32 0.0, %v208
    %v213 = vmul.f32 %v209, %v185
    %v214 = vmul.f32 %v210, %v186
    %v215 = vmul.f32 %v211, %v187
    %v216 = vmul.f32 %v212, %v188
    %vm217 = vcmask 1040384
    %v218 = vsel %vm217, %v213, 0.0
    %v219 = vsel %vm217, %v214, 0.0
    %v220 = vadd.f32 %v218, %v219
    %v221 = vsel %vm217, %v215, 0.0
    %v222 = vadd.f32 %v220, %v221
    %v223 = vsel %vm217, %v216, 0.0
    %v224 = vadd.f32 %v222, %v223
    %225 = vadd.xlane.f32.xlu0 %v224
    %v226 = vpop.xlane.xlu0 %225
    %v227 = vrot.slane %v226, 4
    %v228 = vadd.f32 %v226, %v227
    %v229 = vrot.slane %v228, 2
    %v230 = vadd.f32 %v228, %v229
    %v231 = vrot.slane %v230, 1
    %v232 = vadd.f32 %v230, %v231
    %s233 = vtos %v232
    %v234 = vstv %s233
    %235 = vst [vmem:[#allocation5] sm:$0x1] %v234
    // Predicated region
    $region18: #{tpu_custom_call.1} parent=1 // pred_check
      _
    $region19: #{tpu_custom_call.1} parent=1 // pred_check_branch
      %237 = sbr.rel (0) target = $region21
    $region20: #{tpu_custom_call.1} parent=1 // pred_region
      %s238 = sadd.s32 0, 0
      %s240 = ssub.s32 16, 16
      %241 = vsyncadd [#allocation4], %s240
      %s242 = smul.addr %s238, 16
      %s243 = scalar_lea.hbm %s3, %s242
      %s245 = sshll.u32 [#allocation5], 4
      %s246 = int_to_ptr.vmem [resolvable:$true] %s245
      %248 = dma.vmem_to_hbm [thread:$0]  %s246, 16, %s243, [#allocation4]
    $region21: #{tpu_custom_call.1} parent=1 // pred_fallthru
      _
    // Predicated region
    $region22: #{tpu_custom_call.1} parent=1 // pred_check
      _
    $region23: #{tpu_custom_call.1} parent=1 // pred_check_branch
      %250 = sbr.rel (0) target = $region25
    $region24: #{tpu_custom_call.1} parent=1 // pred_region
      %251 = dma.done [#allocation4], 16
    $region25: #{tpu_custom_call.1} parent=1 // pred_fallthru
      _
    %252 = vsyncpa [#allocation3], 1
    %253 = vsyncpa [#allocation4], 1

</llo_original>
